<compile_context>
chip_gen: v7x
topology: tpu7x:2x2x1
jax: 0.10.0
libtpu: 0.0.40
codegen_flags: <defaults>
</compile_context>

<pallas_src>
import functools

import jax
import jax.numpy as jnp
from jax.experimental import pallas as pl
from jax.experimental.pallas import tpu as pltpu


def _fused_kernel(inv_hw, hw, tile, x_ref, w1_ref, w2_ref, o_ref, max_sc, sum_sc):
    """x_ref: (1, C, tile) block; w1_ref: (hid, C); w2_ref: (C, hid);
    o_ref: (1, C, 1) per-batch attention (written at the last spatial tile);
    max_sc/sum_sc: (C, 1) f32 running accumulators (persist across the s axis)."""
    s = pl.program_id(1)
    last = pl.num_programs(1) - 1

    x = x_ref[0].astype(jnp.float32)                        # (C, tile)

    if hw % tile != 0:
        # Mask the trailing partial tile (static no-op when tile divides HW).
        col = jax.lax.broadcasted_iota(jnp.int32, x.shape, 1)
        valid = col < (hw - s * tile)
        x_max = jnp.where(valid, x, -jnp.inf)
        x_sum = jnp.where(valid, x, 0.0)
    else:
        x_max = x
        x_sum = x

    tile_max = jnp.max(x_max, axis=1, keepdims=True)        # (C, 1)
    tile_sum = jnp.sum(x_sum, axis=1, keepdims=True)        # (C, 1)

    @pl.when(s == 0)
    def _():
        max_sc[...] = tile_max
        sum_sc[...] = tile_sum

    @pl.when(s != 0)
    def _():
        max_sc[...] = jnp.maximum(max_sc[...], tile_max)
        sum_sc[...] = sum_sc[...] + tile_sum

    # Fused SE-MLP + sigmoid epilogue, once per batch at the last spatial tile.
    @pl.when(s == last)
    def _():
        w1 = w1_ref[...].astype(jnp.float32)                # (hid, C)
        w2 = w2_ref[...].astype(jnp.float32)                # (C, hid)
        maxp = max_sc[...]                                  # (C, 1)
        avgp = sum_sc[...] * inv_hw                         # (C, 1)
        h = (jnp.maximum(jnp.dot(w1, maxp, preferred_element_type=jnp.float32), 0.0)
             + jnp.maximum(jnp.dot(w1, avgp, preferred_element_type=jnp.float32), 0.0))
        # w2 is linear -> one matmul on the summed hidden activations.
        logits = jnp.dot(w2, h, preferred_element_type=jnp.float32)   # (C, 1)
        o_ref[0] = (1.0 / (1.0 + jnp.exp(-logits))).astype(o_ref.dtype)


def _vmem_budget():
    """(vmem_limit_bytes, per-block byte budget) tuned per TPU generation."""
    try:
        kind = jax.devices()[0].device_kind.lower()
    except Exception:  # pragma: no cover - defensive
        kind = ""
    if "v7" in kind:
        phys = 64 << 20          # v7x: 64 MiB VMEM per TensorCore
    elif "v5" in kind or "v6" in kind:
        phys = 128 << 20         # v5e / v6e: 128 MiB VMEM
    else:
        phys = 64 << 20          # unknown generation: be conservative
    vmem_limit = min((phys * 3) // 4, 96 << 20)
    block_bytes = vmem_limit // 4    # double-buffered input stays <= limit / 2
    return vmem_limit, block_bytes


def _pick_tile_hw(hw, c, itemsize, block_bytes):
    max_tile = max(128, block_bytes // max(1, c * itemsize))
    if hw <= max_tile:
        return hw                        # single full-extent tile (no 128 constraint)
    return (max_tile // 128) * 128       # lane-aligned; trailing partial tile is masked


def channel_attention(x, w1, w2, *, tile_hw=None):
    """x: (B, C, H, W); w1: (C//r, C); w2: (C, C//r).
    Returns sigmoid(se(maxpool(x)) + se(avgpool(x))) with shape (B, C, 1, 1)."""
    B, C, H, W = x.shape
    HW = H * W
    hid = w1.shape[0]
    assert w1.shape == (hid, C) and w2.shape == (C, hid)

    vmem_limit, block_bytes = _vmem_budget()
    itemsize = jnp.dtype(x.dtype).itemsize
    if tile_hw is None:
        tile_hw = _pick_tile_hw(HW, C, itemsize, block_bytes)
    else:
        # Sanitize user tile: block last dim must be a multiple of 128 or the full extent.
        tile_hw = min(int(tile_hw), HW)
        if tile_hw != HW:
            tile_hw = (tile_hw // 128) * 128
            if tile_hw < 128:
                tile_hw = HW if HW < 128 else 128
    num_tiles = pl.cdiv(HW, tile_hw)

    x_flat = x.reshape(B, C, HW)

    out = pl.pallas_call(
        functools.partial(_fused_kernel, 1.0 / float(HW), HW, tile_hw),
        out_shape=jax.ShapeDtypeStruct((B, C, 1), x.dtype),
        grid_spec=pltpu.PrefetchScalarGridSpec(
            num_scalar_prefetch=0,
            grid=(B, num_tiles),
            in_specs=[
                pl.BlockSpec((1, C, tile_hw), lambda b, s: (b, 0, s)),
                pl.BlockSpec((hid, C), lambda b, s: (0, 0)),   # resident, DMA'd once
                pl.BlockSpec((C, hid), lambda b, s: (0, 0)),   # resident, DMA'd once
            ],
            out_specs=pl.BlockSpec((1, C, 1), lambda b, s: (b, 0, 0)),
            scratch_shapes=[
                pltpu.VMEM((C, 1), jnp.float32),   # running max
                pltpu.VMEM((C, 1), jnp.float32),   # running sum
            ],
        ),
        compiler_params=pltpu.CompilerParams(
            dimension_semantics=("parallel", "arbitrary"),
            vmem_limit_bytes=vmem_limit,
        ),
    )(x_flat, w1, w2)

    return out.reshape(B, C, 1, 1)


def _reference(x, w1, w2):
    # Plain-JAX reference mirroring the PyTorch forward.
    max_p = jnp.max(x, axis=(2, 3))                    # (B, C)
    avg_p = jnp.mean(x, axis=(2, 3))                   # (B, C)

    def se(v):                                         # v: (B, C)
        h = jnp.maximum(v @ w1.T, 0.0)                 # (B, C//r)
        return h @ w2.T                                # (B, C)

    out = jax.nn.sigmoid(se(max_p) + se(avg_p))        # (B, C)
    return out[:, :, None, None]                       # (B, C, 1, 1)


if __name__ == "__main__":
    key = jax.random.PRNGKey(0)

    def run_case(B, C, H, W, reduction, tile_hw):
        hid = max(1, C // reduction)
        kx, k1, k2 = jax.random.split(jax.random.fold_in(key, H * W + C), 3)
        x = jax.random.normal(kx, (B, C, H, W), dtype=jnp.float32)
        # Conv2d 1x1, bias=False -> plain matrices.
        w1 = jax.random.normal(k1, (hid, C), dtype=jnp.float32) * (1.0 / jnp.sqrt(C))
        w2 = jax.random.normal(k2, (C, hid), dtype=jnp.float32) * (1.0 / jnp.sqrt(hid))

        out = jax.block_until_ready(channel_attention(x, w1, w2, tile_hw=tile_hw))
        ref = _reference(x, w1, w2)
        assert out.shape == (B, C, 1, 1)
        assert jnp.allclose(out, ref, atol=1e-5, rtol=1e-5), (B, C, H, W)

    # Even split: HW=256 -> two full 128-wide spatial tiles (running-reduce path).
    run_case(B=2, C=64, H=16, W=16, reduction=16, tile_hw=128)
    # Ragged split: HW=400 -> 4 tiles, last tile has 16 valid columns (masked path).
    run_case(B=2, C=64, H=20, W=20, reduction=16, tile_hw=128)

    print("KERNEL_OK")
</pallas_src>

<mosaic_0001>
module attributes {stable_mosaic.version = 11 : i64} {
  func.func @_fused_kernel(%arg0: i32, %arg1: i32, %arg2: memref<1x64x128xf32, #tpu.memory_space<vmem>>, %arg3: memref<4x64xf32, #tpu.memory_space<vmem>>, %arg4: memref<64x4xf32, #tpu.memory_space<vmem>>, %arg5: memref<1x64x1xf32, #tpu.memory_space<vmem>>, %arg6: memref<64x1xf32, #tpu.memory_space<vmem>>, %arg7: memref<64x1xf32, #tpu.memory_space<vmem>>) attributes {dimension_semantics = [#tpu.dimension_semantics<parallel>, #tpu.dimension_semantics<arbitrary>], iteration_bounds = array<i64: 2, 2>, scalar_prefetch = 0 : i64, scratch_operands = 2 : i64, tpu.core_type = #tpu.core_type<tc>, window_params = [{transform_indices = @transform_0, window_bounds = array<i64: 1, 64, 128>}, {pipeline_mode = #tpu.pipeline_mode<synchronous>, transform_indices = @transform_1, window_bounds = array<i64: 4, 64>}, {pipeline_mode = #tpu.pipeline_mode<synchronous>, transform_indices = @transform_2, window_bounds = array<i64: 64, 4>}, {transform_indices = @transform_3, window_bounds = array<i64: 1, 64, 1>}]} {
    %c0 = arith.constant 0 : index
    %c0_0 = arith.constant 0 : index
    %c0_1 = arith.constant 0 : index
    %0 = vector.load %arg2[%c0, %c0_0, %c0_1] : memref<1x64x128xf32, #tpu.memory_space<vmem>>, vector<1x64x128xf32>
    %1 = vector.shape_cast %0 : vector<1x64x128xf32> to vector<64x128xf32>
    %cst = arith.constant dense<0xFF800000> : vector<64xf32>
    %2 = vector.multi_reduction <maximumf>, %1, %cst [1] : vector<64x128xf32> to vector<64xf32>
    %3 = vector.shape_cast %2 : vector<64xf32> to vector<64x1xf32>
    %cst_2 = arith.constant dense<0.000000e+00> : vector<64xf32>
    %4 = vector.multi_reduction <add>, %1, %cst_2 [1] : vector<64x128xf32> to vector<64xf32>
    %5 = vector.shape_cast %4 : vector<64xf32> to vector<64x1xf32>
    %c0_i32 = arith.constant 0 : i32
    %6 = arith.cmpi eq, %arg1, %c0_i32 : i32
    %7 = arith.extui %6 : i1 to i32
    %c0_i32_3 = arith.constant 0 : i32
    %8 = arith.cmpi ne, %7, %c0_i32_3 : i32
    scf.if %8 {
      %c0_7 = arith.constant 0 : index
      %c0_8 = arith.constant 0 : index
      %15 = vector.load %arg6[%c0_7, %c0_8] : memref<64x1xf32, #tpu.memory_space<vmem>>, vector<64x1xf32>
      tpu.vector_store %arg6[%c0_7, %c0_8], %3 {strides = array<i32>} : memref<64x1xf32, #tpu.memory_space<vmem>>, vector<64x1xf32>,
      %c0_9 = arith.constant 0 : index
      %c0_10 = arith.constant 0 : index
      %16 = vector.load %arg7[%c0_9, %c0_10] : memref<64x1xf32, #tpu.memory_space<vmem>>, vector<64x1xf32>
      tpu.vector_store %arg7[%c0_9, %c0_10], %5 {strides = array<i32>} : memref<64x1xf32, #tpu.memory_space<vmem>>, vector<64x1xf32>,
    } else {
    }
    %c0_i32_4 = arith.constant 0 : i32
    %9 = arith.cmpi ne, %arg1, %c0_i32_4 : i32
    %10 = arith.extui %9 : i1 to i32
    %c0_i32_5 = arith.constant 0 : i32
    %11 = arith.cmpi ne, %10, %c0_i32_5 : i32
    scf.if %11 {
      %c0_7 = arith.constant 0 : index
      %c0_8 = arith.constant 0 : index
      %15 = vector.load %arg6[%c0_7, %c0_8] : memref<64x1xf32, #tpu.memory_space<vmem>>, vector<64x1xf32>
      %16 = arith.maximumf %15, %3 : vector<64x1xf32>
      %c0_9 = arith.constant 0 : index
      %c0_10 = arith.constant 0 : index
      %17 = vector.load %arg6[%c0_9, %c0_10] : memref<64x1xf32, #tpu.memory_space<vmem>>, vector<64x1xf32>
      tpu.vector_store %arg6[%c0_9, %c0_10], %16 {strides = array<i32>} : memref<64x1xf32, #tpu.memory_space<vmem>>, vector<64x1xf32>,
      %c0_11 = arith.constant 0 : index
      %c0_12 = arith.constant 0 : index
      %18 = vector.load %arg7[%c0_11, %c0_12] : memref<64x1xf32, #tpu.memory_space<vmem>>, vector<64x1xf32>
      %19 = arith.addf %18, %5 : vector<64x1xf32>
      %c0_13 = arith.constant 0 : index
      %c0_14 = arith.constant 0 : index
      %20 = vector.load %arg7[%c0_13, %c0_14] : memref<64x1xf32, #tpu.memory_space<vmem>>, vector<64x1xf32>
      tpu.vector_store %arg7[%c0_13, %c0_14], %19 {strides = array<i32>} : memref<64x1xf32, #tpu.memory_space<vmem>>, vector<64x1xf32>,
    } else {
    }
    %c1_i32 = arith.constant 1 : i32
    %12 = arith.cmpi eq, %arg1, %c1_i32 : i32
    %13 = arith.extui %12 : i1 to i32
    %c0_i32_6 = arith.constant 0 : i32
    %14 = arith.cmpi ne, %13, %c0_i32_6 : i32
    scf.if %14 {
      %c0_7 = arith.constant 0 : index
      %c0_8 = arith.constant 0 : index
      %15 = vector.load %arg3[%c0_7, %c0_8] : memref<4x64xf32, #tpu.memory_space<vmem>>, vector<4x64xf32>
      %c0_9 = arith.constant 0 : index
      %c0_10 = arith.constant 0 : index
      %16 = vector.load %arg4[%c0_9, %c0_10] : memref<64x4xf32, #tpu.memory_space<vmem>>, vector<64x4xf32>
      %c0_11 = arith.constant 0 : index
      %c0_12 = arith.constant 0 : index
      %17 = vector.load %arg6[%c0_11, %c0_12] : memref<64x1xf32, #tpu.memory_space<vmem>>, vector<64x1xf32>
      %c0_13 = arith.constant 0 : index
      %c0_14 = arith.constant 0 : index
      %18 = vector.load %arg7[%c0_13, %c0_14] : memref<64x1xf32, #tpu.memory_space<vmem>>, vector<64x1xf32>
      %cst_15 = arith.constant 3.906250e-03 : f32
      %19 = vector.broadcast %cst_15 : f32 to vector<64x1xf32>
      %20 = arith.mulf %18, %19 : vector<64x1xf32>
      %cst_16 = arith.constant dense<0.000000e+00> : vector<4x1xf32>
      %21 = tpu.matmul %15, %17, %cst_16 {dimension_numbers = #tpu.dot_dimension_numbers<[1], [0], [0], [1], [0, 0, 1, 1], [], []>} : vector<4x64xf32>, vector<64x1xf32>, vector<4x1xf32> -> vector<4x1xf32>
      %cst_17 = arith.constant 0.000000e+00 : f32
      %22 = vector.broadcast %cst_17 : f32 to vector<4x1xf32>
      %23 = arith.maximumf %21, %22 : vector<4x1xf32>
      %cst_18 = arith.constant dense<0.000000e+00> : vector<4x1xf32>
      %24 = tpu.matmul %15, %20, %cst_18 {dimension_numbers = #tpu.dot_dimension_numbers<[1], [0], [0], [1], [0, 0, 1, 1], [], []>} : vector<4x64xf32>, vector<64x1xf32>, vector<4x1xf32> -> vector<4x1xf32>
      %cst_19 = arith.constant 0.000000e+00 : f32
      %25 = vector.broadcast %cst_19 : f32 to vector<4x1xf32>
      %26 = arith.maximumf %24, %25 : vector<4x1xf32>
      %27 = arith.addf %23, %26 : vector<4x1xf32>
      %cst_20 = arith.constant dense<0.000000e+00> : vector<64x1xf32>
      %28 = tpu.matmul %16, %27, %cst_20 {dimension_numbers = #tpu.dot_dimension_numbers<[1], [0], [0], [1], [0, 0, 1, 1], [], []>} : vector<64x4xf32>, vector<4x1xf32>, vector<64x1xf32> -> vector<64x1xf32>
      %cst_21 = arith.constant 0.000000e+00 : f32
      %29 = vector.broadcast %cst_21 : f32 to vector<64x1xf32>
      %30 = arith.subf %29, %28 : vector<64x1xf32>
      %31 = math.exp %30 : vector<64x1xf32>
      %cst_22 = arith.constant 1.000000e+00 : f32
      %32 = vector.broadcast %cst_22 : f32 to vector<64x1xf32>
      %33 = arith.addf %32, %31 : vector<64x1xf32>
      %cst_23 = arith.constant 1.000000e+00 : f32
      %34 = vector.broadcast %cst_23 : f32 to vector<64x1xf32>
      %35 = arith.divf %34, %33 : vector<64x1xf32>
      %c0_24 = arith.constant 0 : index
      %c0_25 = arith.constant 0 : index
      %c0_26 = arith.constant 0 : index
      %36 = vector.load %arg5[%c0_24, %c0_25, %c0_26] : memref<1x64x1xf32, #tpu.memory_space<vmem>>, vector<1x64x1xf32>
      %37 = vector.shape_cast %36 : vector<1x64x1xf32> to vector<64x1xf32>
      %38 = vector.shape_cast %35 : vector<64x1xf32> to vector<1x64x1xf32>
      tpu.vector_store %arg5[%c0_24, %c0_25, %c0_26], %38 {strides = array<i32>} : memref<1x64x1xf32, #tpu.memory_space<vmem>>, vector<1x64x1xf32>,
    } else {
    }
    return
  }
  func.func @transform_0(%arg0: i32, %arg1: i32) -> (i32, i32, i32) {
    %c0_i32 = arith.constant 0 : i32
    %c0_i32_0 = arith.constant 0 : i32
    return %arg0, %c0_i32, %arg1 : i32, i32, i32
  }
  func.func @transform_1(%arg0: i32, %arg1: i32) -> (i32, i32) {
    %c0_i32 = arith.constant 0 : i32
    %c0_i32_0 = arith.constant 0 : i32
    %c0_i32_1 = arith.constant 0 : i32
    return %c0_i32, %c0_i32_0 : i32, i32
  }
  func.func @transform_2(%arg0: i32, %arg1: i32) -> (i32, i32) {
    %c0_i32 = arith.constant 0 : i32
    %c0_i32_0 = arith.constant 0 : i32
    %c0_i32_1 = arith.constant 0 : i32
    return %c0_i32, %c0_i32_0 : i32, i32
  }
  func.func @transform_3(%arg0: i32, %arg1: i32) -> (i32, i32, i32) {
    %c0_i32 = arith.constant 0 : i32
    %c0_i32_0 = arith.constant 0 : i32
    %c0_i32_1 = arith.constant 0 : i32
    return %arg0, %c0_i32, %c0_i32_0 : i32, i32, i32
  }
}

</mosaic_0001>

<llo_original>
// kernel: tpu_custom_call.1
$region0: #{tpu_custom_call.1}
  #allocation0 [shape = 'u32[]', space=smem, size = 0x4, offset = 0x4, fixed_abs, tag = 'smem constant byte address 0x4 - core index']
  #allocation1 [shape = 'u32[144,128]{1,0:T(1,128)}', space=vmem, size = 0x12000, scoped, tag = 'internal scratch']
  #allocation2 [shape = 'f32[64,1]{1,0:T(8,128)}', space=vmem, size = 0x8000, scoped, tag = 'scratch operand']
  #allocation3 [shape = 'f32[64,1]{1,0:T(8,128)}', space=vmem, size = 0x8000, scoped, tag = 'scratch operand']
  %s0 = inlined_call_operand.hbm [shape: f32[2,64,256], index: 0, kind: input, shape index: {}]
  %s1 = inlined_call_operand.vmem [shape: f32[4,64], index: 1, kind: input, shape index: {}]
  %s2 = inlined_call_operand.vmem [shape: f32[64,4], index: 2, kind: input, shape index: {}]
  %s3 = inlined_call_operand.vmem [shape: f32[2,64,1], index: 3, kind: output, shape index: {}]
  %s4 = sld [smem:[#allocation0]]
  $region61: #{tpu_custom_call.1} parent=0
    _
  %s6 = ssub.s32 1, %s4
  %s7 = scalar_select 0, %s6, %s4
  $region1: #{tpu_custom_call.1} parent=0
    #allocation4 [shape = 'u8[65536]{0}', space=vmem, size = 0x10000, scoped, tag = 'input window, operand 0']
    #allocation5 [shape = 's32[2]{0}', space=sflag, size = 0x8, scoped, tag = 'scoped memory for tpu_custom_call.1']
    %8 = vsyncpa [#allocation5], 0
    %s9 = scalar_lea.sflag [#allocation5], 1
    %10 = vsyncpa %s9, 0
    loop: start=0, step=1, limit=6
    $region2: #{tpu_custom_call.1} parent=1 // loop_pre_header
      _
    $region3: #{tpu_custom_call.1} parent=1 // loop_header
      %s12 = sphi 0, %s16
      %p13 = scmp.ge.s32.totalorder %s12, 6
      %s19 = sphi 0, %s31
      %s20 = sphi 0, %s27
      %s21 = sphi 0, %s19
      %s22 = sphi 0, %s20
      %s23 = sphi 0, %s21
      %s24 = sphi 0, %s22
      %s36 = sphi 0, %s38
      %s39 = sphi 0, %s36
      %s40 = sphi 0, %s39
      %s56 = sphi 0, %s40
      %s60 = sphi 0, %s60
      %s62 = sphi 0, %s60
      %s63 = sphi 0, %s62
      %s77 = sphi 0, %s63
      %s81 = sphi 0, %s81
      %s83 = sphi 0, %s81
      %s84 = sphi 0, %s83
      %s98 = sphi 0, %s84
      %s104 = sphi 0, %s106
      %s107 = sphi 0, %s104
      %s108 = sphi 0, %s107
      %s124 = sphi 0, %s108
    $region4: #{tpu_custom_call.1} parent=1 // loop_header_branch
      %15 = sbr.rel (%p13) target = $region8
    $region5: #{tpu_custom_call.1} parent=1 // loop_body
      %s17 = ssub.s32 %s12, 1
      %s18 = ssub.s32 %s12, 2
      %s25 = sadd.s32 1, %s20
      %p26 = scmp.ge.s32.totalorder %s25, 2
      %s27 = scalar_select %p26, 0, %s25
      %s28 = sadd.s32 1, %s19
      %s29 = scalar_select %p26, %s28, %s19
      %p30 = scmp.ge.s32.totalorder %s29, 2
      %s31 = scalar_select %p30, 0, %s29
      %s32 = ssub.s32 %s19, %s31
      %s33 = ssub.s32 %s20, %s27
      %s34 = sor.u32 %s32, %s33
      %p35 = scmp.eq.s32.totalorder %s34, 0
      %s37 = sadd.s32 %s36, 1
      %s38 = scalar_select %p35, %s36, %s37
      %p41 = pneg %p35
      %p42 = scmp.eq.s32.totalorder %s12, 3
      %p43 = por %p41, %p42
      %p44 = scmp.ne.s32.totalorder %s36, %s39
      %p45 = scmp.eq.s32.totalorder %s12, 0
      %p46 = por %p44, %p45
      %p47 = scmp.ne.s32.totalorder %s36, %s39
      %p48 = scmp.eq.s32.totalorder %s17, 3
      %p49 = por %p47, %p48
      %p50 = scmp.ne.s32.totalorder %s39, %s40
      %p51 = scmp.eq.s32.totalorder %s17, 0
      %p52 = por %p50, %p51
      %p53 = scmp.ne.s32.totalorder %s39, %s40
      %p54 = scmp.eq.s32.totalorder %s18, 3
      %p55 = por %p53, %p54
      %p57 = scmp.ne.s32.totalorder %s40, %s56
      %p58 = scmp.eq.s32.totalorder %s18, 0
      %p59 = por %p57, %p58
      %s61 = sadd.s32 %s60, 1
      %p64 = scmp.eq.s32.totalorder %s12, 3
      %p65 = scmp.ne.s32.totalorder %s60, %s62
      %p66 = scmp.eq.s32.totalorder %s12, 0
      %p67 = por %p65, %p66
      %p68 = scmp.ne.s32.totalorder %s60, %s62
      %p69 = scmp.eq.s32.totalorder %s17, 3
      %p70 = por %p68, %p69
      %p71 = scmp.ne.s32.totalorder %s62, %s63
      %p72 = scmp.eq.s32.totalorder %s17, 0
      %p73 = por %p71, %p72
      %p74 = scmp.ne.s32.totalorder %s62, %s63
      %p75 = scmp.eq.s32.totalorder %s18, 3
      %p76 = por %p74, %p75
      %p78 = scmp.ne.s32.totalorder %s63, %s77
      %p79 = scmp.eq.s32.totalorder %s18, 0
      %p80 = por %p78, %p79
      %s82 = sadd.s32 %s81, 1
      %p85 = scmp.eq.s32.totalorder %s12, 3
      %p86 = scmp.ne.s32.totalorder %s81, %s83
      %p87 = scmp.eq.s32.totalorder %s12, 0
      %p88 = por %p86, %p87
      %p89 = scmp.ne.s32.totalorder %s81, %s83
      %p90 = scmp.eq.s32.totalorder %s17, 3
      %p91 = por %p89, %p90
      %p92 = scmp.ne.s32.totalorder %s83, %s84
      %p93 = scmp.eq.s32.totalorder %s17, 0
      %p94 = por %p92, %p93
      %p95 = scmp.ne.s32.totalorder %s83, %s84
      %p96 = scmp.eq.s32.totalorder %s18, 3
      %p97 = por %p95, %p96
      %p99 = scmp.ne.s32.totalorder %s84, %s98
      %p100 = scmp.eq.s32.totalorder %s18, 0
      %p101 = por %p99, %p100
      %s102 = ssub.s32 %s19, %s31
      %p103 = scmp.eq.s32.totalorder %s102, 0
      %s105 = sadd.s32 %s104, 1
      %s106 = scalar_select %p103, %s104, %s105
      %p109 = pneg %p103
      %p110 = scmp.eq.s32.totalorder %s12, 3
      %p111 = por %p109, %p110
      %p112 = scmp.ne.s32.totalorder %s104, %s107
      %p113 = scmp.eq.s32.totalorder %s12, 0
      %p114 = por %p112, %p113
      %p115 = scmp.ne.s32.totalorder %s104, %s107
      %p116 = scmp.eq.s32.totalorder %s17, 3
      %p117 = por %p115, %p116
      %p118 = scmp.ne.s32.totalorder %s107, %s108
      %p119 = scmp.eq.s32.totalorder %s17, 0
      %p120 = por %p118, %p119
      %p121 = scmp.ne.s32.totalorder %s107, %s108
      %p122 = scmp.eq.s32.totalorder %s18, 3
      %p123 = por %p121, %p122
      %p125 = scmp.ne.s32.totalorder %s108, %s124
      %p126 = scmp.eq.s32.totalorder %s18, 0
      %p127 = por %p125, %p126
      %p128 = scmp.le.s32.totalorder 1, %s12
      %p129 = scmp.lt.s32.totalorder %s12, 5
      %p130 = pnand %p128, %p129
      %p131 = pneg %p130
      // Predicated region
      $region9: #{tpu_custom_call.1} parent=5 // pred_check
        _
      $region10: #{tpu_custom_call.1} parent=5 // pred_check_branch
        %133 = sbr.rel (%p130) target = $region12
      $region11: #{tpu_custom_call.1} parent=5 // pred_region
        %s134 = ssub.s32 %s12, 1
        // Predicated region
        $region13: #{tpu_custom_call.1} parent=11 // pred_check
          %p135 = pneg %p73
        $region14: #{tpu_custom_call.1} parent=11 // pred_check_branch
          %137 = sbr.rel (%p135) target = $region16
        $region15: #{tpu_custom_call.1} parent=11 // pred_region
          _
        $region16: #{tpu_custom_call.1} parent=11 // pred_fallthru
          _
        // Predicated region
        $region17: #{tpu_custom_call.1} parent=11 // pred_check
          %p138 = pneg %p94
        $region18: #{tpu_custom_call.1} parent=11 // pred_check_branch
          %140 = sbr.rel (%p138) target = $region20
        $region19: #{tpu_custom_call.1} parent=11 // pred_region
          _
        $region20: #{tpu_custom_call.1} parent=11 // pred_fallthru
          _
      $region12: #{tpu_custom_call.1} parent=5 // pred_fallthru
        _
      %p141 = scmp.lt.s32.totalorder %s12, 4
      // Predicated region
      $region21: #{tpu_custom_call.1} parent=5 // pred_check
        %p142 = pneg %p141
      $region22: #{tpu_custom_call.1} parent=5 // pred_check_branch
        %144 = sbr.rel (%p142) target = $region24
      $region23: #{tpu_custom_call.1} parent=5 // pred_region
        // Predicated region
        $region25: #{tpu_custom_call.1} parent=23 // pred_check
          %p145 = pneg %p46
        $region26: #{tpu_custom_call.1} parent=23 // pred_check_branch
          %147 = sbr.rel (%p145) target = $region28
        $region27: #{tpu_custom_call.1} parent=23 // pred_region
          %s148 = sand.u32 %s36, 1
          %s149 = scalar_lea.sflag [#allocation5], %s148
          %s150 = sand.u32 %s36, 1
          %s151 = smul.addr %s150, 64
          %s152 = scalar_lea.vmem [#allocation4], %s151
          %s154 = ssub.s32 1024, 1024
          %155 = vsyncadd %s149, %s154
          %s156 = smul.addr %s19, 16
          %s157 = sadd.s32 %s20, %s156
          %s158 = smul.addr %s157, 128
          %s159 = scalar_lea.hbm %s0, %s158
          %s160 = sshll.u32 %s152, 4
          %s161 = int_to_ptr.vmem [resolvable:$true] %s160
          %166 = dma.hbm_to_vmem [thread:$0]  %s159, 1024, %s161, %s149, 256, 128, 8
        $region28: #{tpu_custom_call.1} parent=23 // pred_fallthru
          _
      $region24: #{tpu_custom_call.1} parent=5 // pred_fallthru
        _
      %p167 = scmp.le.s32.totalorder 1, %s12
      %p168 = scmp.lt.s32.totalorder %s12, 5
      %p169 = pnand %p167, %p168
      %p170 = pneg %p169
      // Predicated region
      $region29: #{tpu_custom_call.1} parent=5 // pred_check
        _
      $region30: #{tpu_custom_call.1} parent=5 // pred_check_branch
        %172 = sbr.rel (%p169) target = $region32
      $region31: #{tpu_custom_call.1} parent=5 // pred_region
        %s173 = ssub.s32 %s12, 1
        %s174 = sand.u32 %s39, 1
        %s175 = scalar_lea.sflag [#allocation5], %s174
        %s176 = sand.u32 %s39, 1
        %s177 = smul.addr %s176, 64
        %s178 = scalar_lea.vmem [#allocation4], %s177
        // Predicated region
        $region33: #{tpu_custom_call.1} parent=31 // pred_check
          %p179 = pneg %p52
        $region34: #{tpu_custom_call.1} parent=31 // pred_check_branch
          %181 = sbr.rel (%p179) target = $region36
        $region35: #{tpu_custom_call.1} parent=31 // pred_region
          %182 = dma.done %s175, 1024
        $region36: #{tpu_custom_call.1} parent=31 // pred_fallthru
          _
        %s183 = sand.u32 %s39, 1
        %s184 = scalar_lea.sflag [#allocation5], %s183
        %s185 = sand.u32 %s39, 1
        %s186 = smul.addr %s185, 64
        %s187 = scalar_lea.vmem [#allocation4], %s186
        %p188 = pneg %p52
        %p189 = pneg %p49
        %p190 = pneg %p73
        %p191 = pneg %p70
        %p192 = pneg %p94
        %p193 = pneg %p91
        %p194 = pneg %p120
        %p195 = pneg %p117
        %p196 = scmp.lt.s32.totalorder %s21, 1
        %s197 = scalar_select %p196, %s21, 1
        %s198 = smul.addr %s197, 8
        %s199 = smul.addr %s198, 8
        %s200 = scalar_lea.vmem %s3, %s199
        %p201 = scmp.lt.s32.totalorder %s21, 1
        %s202 = scalar_select %p201, %s21, 1
        %s203 = smul.addr %s202, 8
        %s204 = smul.addr %s203, 8
        %s205 = scalar_lea.vmem %s3, %s204
        %v206 = vld [vmem:[%s178] sm:$0xff]
        %v207 = vld [vmem:[%s178 + $0x8] sm:$0xff]
        %v208 = vld [vmem:[%s178 + $0x10] sm:$0xff]
        %v209 = vld [vmem:[%s178 + $0x18] sm:$0xff]
        %v210 = vld [vmem:[%s178 + $0x20] sm:$0xff]
        %v211 = vld [vmem:[%s178 + $0x28] sm:$0xff]
        %v212 = vld [vmem:[%s178 + $0x30] sm:$0xff]
        %v213 = vld [vmem:[%s178 + $0x38] sm:$0xff]
        %214 = vmax.xlane.f32.xlu0 %v206
        %v215 = vpop.xlane.xlu0 %214
        %216 = vmax.xlane.f32.xlu0 %v207
        %v217 = vpop.xlane.xlu0 %216
        %218 = vmax.xlane.f32.xlu0 %v208
        %v219 = vpop.xlane.xlu0 %218
        %220 = vmax.xlane.f32.xlu0 %v209
        %v221 = vpop.xlane.xlu0 %220
        %222 = vmax.xlane.f32.xlu0 %v210
        %v223 = vpop.xlane.xlu0 %222
        %224 = vmax.xlane.f32.xlu0 %v211
        %v225 = vpop.xlane.xlu0 %224
        %226 = vmax.xlane.f32.xlu0 %v212
        %v227 = vpop.xlane.xlu0 %226
        %228 = vmax.xlane.f32.xlu0 %v213
        %v229 = vpop.xlane.xlu0 %228
        %230 = vadd.xlane.f32.xlu0 %v206
        %v231 = vpop.xlane.xlu0 %230
        %232 = vadd.xlane.f32.xlu0 %v207
        %v233 = vpop.xlane.xlu0 %232
        %234 = vadd.xlane.f32.xlu0 %v208
        %v235 = vpop.xlane.xlu0 %234
        %236 = vadd.xlane.f32.xlu0 %v209
        %v237 = vpop.xlane.xlu0 %236
        %238 = vadd.xlane.f32.xlu0 %v210
        %v239 = vpop.xlane.xlu0 %238
        %240 = vadd.xlane.f32.xlu0 %v211
        %v241 = vpop.xlane.xlu0 %240
        %242 = vadd.xlane.f32.xlu0 %v212
        %v243 = vpop.xlane.xlu0 %242
        %244 = vadd.xlane.f32.xlu0 %v213
        %v245 = vpop.xlane.xlu0 %244
        %p246 = scmp.eq.s32.totalorder %s22, 0
        // Predicated region
        $region37: #{tpu_custom_call.1} parent=31 // pred_check
          %p247 = pneg %p246
        $region38: #{tpu_custom_call.1} parent=31 // pred_check_branch
          %249 = sbr.rel (%p247) target = $region40
        $region39: #{tpu_custom_call.1} parent=31 // pred_region
          %vm250 = vcmask 7168
          %251 = vst.msk [vmem:[#allocation2] sm:$0xff] %vm250, %v215
          %252 = vst.msk [vmem:[#allocation2 + $0x8] sm:$0xff] %vm250, %v217
          %253 = vst.msk [vmem:[#allocation2 + $0x10] sm:$0xff] %vm250, %v219
          %254 = vst.msk [vmem:[#allocation2 + $0x18] sm:$0xff] %vm250, %v221
          %255 = vst.msk [vmem:[#allocation2 + $0x20] sm:$0xff] %vm250, %v223
          %256 = vst.msk [vmem:[#allocation2 + $0x28] sm:$0xff] %vm250, %v225
          %257 = vst.msk [vmem:[#allocation2 + $0x30] sm:$0xff] %vm250, %v227
          %258 = vst.msk [vmem:[#allocation2 + $0x38] sm:$0xff] %vm250, %v229
          %259 = vst.msk [vmem:[#allocation3] sm:$0xff] %vm250, %v231
          %260 = vst.msk [vmem:[#allocation3 + $0x8] sm:$0xff] %vm250, %v233
          %261 = vst.msk [vmem:[#allocation3 + $0x10] sm:$0xff] %vm250, %v235
          %262 = vst.msk [vmem:[#allocation3 + $0x18] sm:$0xff] %vm250, %v237
          %263 = vst.msk [vmem:[#allocation3 + $0x20] sm:$0xff] %vm250, %v239
          %264 = vst.msk [vmem:[#allocation3 + $0x28] sm:$0xff] %vm250, %v241
          %265 = vst.msk [vmem:[#allocation3 + $0x30] sm:$0xff] %vm250, %v243
          %266 = vst.msk [vmem:[#allocation3 + $0x38] sm:$0xff] %vm250, %v245
        $region40: #{tpu_custom_call.1} parent=31 // pred_fallthru
          _
        %p267 = scmp.ne.s32.totalorder %s22, 0
        // Predicated region
        $region41: #{tpu_custom_call.1} parent=31 // pred_check
          %p268 = pneg %p267
        $region42: #{tpu_custom_call.1} parent=31 // pred_check_branch
          %270 = sbr.rel (%p268) target = $region44
        $region43: #{tpu_custom_call.1} parent=31 // pred_region
          %v271 = vld [vmem:[#allocation2] sm:$0xff]
          %v272 = vld [vmem:[#allocation2 + $0x8] sm:$0xff]
          %v273 = vld [vmem:[#allocation2 + $0x10] sm:$0xff]
          %v274 = vld [vmem:[#allocation2 + $0x18] sm:$0xff]
          %v275 = vld [vmem:[#allocation2 + $0x20] sm:$0xff]
          %v276 = vld [vmem:[#allocation2 + $0x28] sm:$0xff]
          %v277 = vld [vmem:[#allocation2 + $0x30] sm:$0xff]
          %v278 = vld [vmem:[#allocation2 + $0x38] sm:$0xff]
          %v279 = vmax.f32 %v271, %v215
          %v280 = vmax.f32 %v272, %v217
          %v281 = vmax.f32 %v273, %v219
          %v282 = vmax.f32 %v274, %v221
          %v283 = vmax.f32 %v275, %v223
          %v284 = vmax.f32 %v276, %v225
          %v285 = vmax.f32 %v277, %v227
          %v286 = vmax.f32 %v278, %v229
          %vm287 = vcmask 7168
          %288 = vst.msk [vmem:[#allocation2] sm:$0xff] %vm287, %v279
          %289 = vst.msk [vmem:[#allocation2 + $0x8] sm:$0xff] %vm287, %v280
          %290 = vst.msk [vmem:[#allocation2 + $0x10] sm:$0xff] %vm287, %v281
          %291 = vst.msk [vmem:[#allocation2 + $0x18] sm:$0xff] %vm287, %v282
          %292 = vst.msk [vmem:[#allocation2 + $0x20] sm:$0xff] %vm287, %v283
          %293 = vst.msk [vmem:[#allocation2 + $0x28] sm:$0xff] %vm287, %v284
          %294 = vst.msk [vmem:[#allocation2 + $0x30] sm:$0xff] %vm287, %v285
          %295 = vst.msk [vmem:[#allocation2 + $0x38] sm:$0xff] %vm287, %v286
          %v296 = vld [vmem:[#allocation3] sm:$0xff]
          %v297 = vld [vmem:[#allocation3 + $0x8] sm:$0xff]
          %v298 = vld [vmem:[#allocation3 + $0x10] sm:$0xff]
          %v299 = vld [vmem:[#allocation3 + $0x18] sm:$0xff]
          %v300 = vld [vmem:[#allocation3 + $0x20] sm:$0xff]
          %v301 = vld [vmem:[#allocation3 + $0x28] sm:$0xff]
          %v302 = vld [vmem:[#allocation3 + $0x30] sm:$0xff]
          %v303 = vld [vmem:[#allocation3 + $0x38] sm:$0xff]
          %v304 = vadd.f32 %v296, %v231
          %v305 = vadd.f32 %v297, %v233
          %v306 = vadd.f32 %v298, %v235
          %v307 = vadd.f32 %v299, %v237
          %v308 = vadd.f32 %v300, %v239
          %v309 = vadd.f32 %v301, %v241
          %v310 = vadd.f32 %v302, %v243
          %v311 = vadd.f32 %v303, %v245
          %312 = vst.msk [vmem:[#allocation3] sm:$0xff] %vm287, %v304
          %313 = vst.msk [vmem:[#allocation3 + $0x8] sm:$0xff] %vm287, %v305
          %314 = vst.msk [vmem:[#allocation3 + $0x10] sm:$0xff] %vm287, %v306
          %315 = vst.msk [vmem:[#allocation3 + $0x18] sm:$0xff] %vm287, %v307
          %316 = vst.msk [vmem:[#allocation3 + $0x20] sm:$0xff] %vm287, %v308
          %317 = vst.msk [vmem:[#allocation3 + $0x28] sm:$0xff] %vm287, %v309
          %318 = vst.msk [vmem:[#allocation3 + $0x30] sm:$0xff] %vm287, %v310
          %319 = vst.msk [vmem:[#allocation3 + $0x38] sm:$0xff] %vm287, %v311
        $region44: #{tpu_custom_call.1} parent=31 // pred_fallthru
          _
        %p320 = scmp.eq.s32.totalorder %s22, 1
        // Predicated region
        $region45: #{tpu_custom_call.1} parent=31 // pred_check
          %p321 = pneg %p320
        $region46: #{tpu_custom_call.1} parent=31 // pred_check_branch
          %323 = sbr.rel (%p321) target = $region48
        $region47: #{tpu_custom_call.1} parent=31 // pred_region
          %v324 = vld [vmem:[%s1] sm:$0xf]
          %v325 = vld [vmem:[%s2] sm:$0xff]
          %v326 = vld [vmem:[%s2 + $0x8] sm:$0xff]
          %v327 = vld [vmem:[%s2 + $0x10] sm:$0xff]
          %v328 = vld [vmem:[%s2 + $0x18] sm:$0xff]
          %v329 = vld [vmem:[%s2 + $0x20] sm:$0xff]
          %v330 = vld [vmem:[%s2 + $0x28] sm:$0xff]
          %v331 = vld [vmem:[%s2 + $0x30] sm:$0xff]
          %v332 = vld [vmem:[%s2 + $0x38] sm:$0xff]
          %v333 = vld [vmem:[#allocation2] sm:$0xff]
          %v334 = vld [vmem:[#allocation2 + $0x8] sm:$0xff]
          %v335 = vld [vmem:[#allocation2 + $0x10] sm:$0xff]
          %v336 = vld [vmem:[#allocation2 + $0x18] sm:$0xff]
          %v337 = vld [vmem:[#allocation2 + $0x20] sm:$0xff]
          %v338 = vld [vmem:[#allocation2 + $0x28] sm:$0xff]
          %v339 = vld [vmem:[#allocation2 + $0x30] sm:$0xff]
          %v340 = vld [vmem:[#allocation2 + $0x38] sm:$0xff]
          %v341 = vld [vmem:[#allocation3] sm:$0xff]
          %v342 = vld [vmem:[#allocation3 + $0x8] sm:$0xff]
          %v343 = vld [vmem:[#allocation3 + $0x10] sm:$0xff]
          %v344 = vld [vmem:[#allocation3 + $0x18] sm:$0xff]
          %v345 = vld [vmem:[#allocation3 + $0x20] sm:$0xff]
          %v346 = vld [vmem:[#allocation3 + $0x28] sm:$0xff]
          %v347 = vld [vmem:[#allocation3 + $0x30] sm:$0xff]
          %v348 = vld [vmem:[#allocation3 + $0x38] sm:$0xff]
          %v349 = vmul.f32 %v341, 0.00390625
          %v350 = vmul.f32 %v342, 0.00390625
          %v351 = vmul.f32 %v343, 0.00390625
          %v352 = vmul.f32 %v344, 0.00390625
          %v353 = vmul.f32 %v345, 0.00390625
          %v354 = vmul.f32 %v346, 0.00390625
          %v355 = vmul.f32 %v347, 0.00390625
          %v356 = vmul.f32 %v348, 0.00390625
          %vm357 = vcmask 523264
          %v359 = vsel %vm357, %v324, 0
          %361 = vmatprep.subr.mxu0 0.0
          %362 = vmatpush1.msra.mxu0 %v333
          %363 = vmatprep.subr.mxu0 0.0
          %364 = vmatpush1.msra.mxu0 %v334
          %365 = vmatprep.subr.mxu0 0.0
          %366 = vmatpush1.msra.mxu0 %v335
          %367 = vmatprep.subr.mxu0 0.0
          %368 = vmatpush1.msra.mxu0 %v336
          %369 = vmatprep.subr.mxu0 0.0
          %370 = vmatpush1.msra.mxu0 %v337
          %371 = vmatprep.subr.mxu0 0.0
          %372 = vmatpush1.msra.mxu0 %v338
          %373 = vmatprep.subr.mxu0 0.0
          %374 = vmatpush1.msra.mxu0 %v339
          %375 = vmatprep.subr.mxu0 0.0
          %376 = vmatpush1.msra.mxu0 %v340
          %377 = vmatprep.subr.mxu0 0.0
          %378 = vmatpush1.msra.mxu0 0.0
          %379 = vmatprep.subr.mxu0 0.0
          %380 = vmatpush1.msra.mxu0 0.0
          %381 = vmatprep.subr.mxu0 0.0
          %382 = vmatpush1.msra.mxu0 0.0
          %383 = vmatprep.subr.mxu0 0.0
          %384 = vmatpush1.msra.mxu0 0.0
          %385 = vmatprep.subr.mxu0 0.0
          %386 = vmatpush1.msra.mxu0 0.0
          %387 = vmatprep.subr.mxu0 0.0
          %388 = vmatpush1.msra.mxu0 0.0
          %389 = vmatprep.subr.mxu0 0.0
          %390 = vmatpush1.msra.mxu0 0.0
          %391 = vmatprep.subr.mxu0 0.0
          %392 = vmatpush1.msra.mxu0 0.0
          %393 = vmatprep.subr.mxu0 0.0
          %394 = vmatpush1.msra.mxu0 0.0
          %395 = vmatprep.subr.mxu0 0.0
          %396 = vmatpush1.msra.mxu0 0.0
          %397 = vmatprep.subr.mxu0 0.0
          %398 = vmatpush1.msra.mxu0 0.0
          %399 = vmatprep.subr.mxu0 0.0
          %400 = vmatpush1.msra.mxu0 0.0
          %401 = vmatprep.subr.mxu0 0.0
          %402 = vmatpush1.msra.mxu0 0.0
          %403 = vmatprep.subr.mxu0 0.0
          %404 = vmatpush1.msra.mxu0 0.0
          %405 = vmatprep.subr.mxu0 0.0
          %406 = vmatpush1.msra.mxu0 0.0
          %407 = vmatprep.subr.mxu0 0.0
          %408 = vmatpush1.msra.mxu0 0.0
          %409 = vmatprep.subr.mxu0 0.0
          %410 = vmatpush1.msra.mxu0 0.0
          %411 = vmatprep.subr.mxu0 0.0
          %412 = vmatpush1.msra.mxu0 0.0
          %413 = vmatprep.subr.mxu0 0.0
          %414 = vmatpush1.msra.mxu0 0.0
          %415 = vmatprep.subr.mxu0 0.0
          %416 = vmatpush1.msra.mxu0 0.0
          %417 = vmatprep.subr.mxu0 0.0
          %418 = vmatpush1.msra.mxu0 0.0
          %419 = vmatprep.subr.mxu0 0.0
          %420 = vmatpush1.msra.mxu0 0.0
          %421 = vmatprep.subr.mxu0 0.0
          %422 = vmatpush1.msra.mxu0 0.0
          %423 = vmatprep.subr.mxu0 0.0
          %424 = vmatpush1.msra.mxu0 0.0
          %425 = vmatprep.mubr.f32.mxu0 0.0
          %426 = vmatmul.mubr.f32.gmra.mrb[0].mxu0 %v359
          %v427 = vpop.f32.mrb[0].mxu0
          %v428 = vadd.f32 0.0, %v427
          %v429 = vpop.f32.mrb[0].mxu0
          %430 = vdwg.mxu0
          %v431 = vmax.f32 %v428, 0.0
          %432 = vmatprep.subr.mxu0 0.0
          %433 = vmatpush1.msra.mxu0 %v349
          %434 = vmatprep.subr.mxu0 0.0
          %435 = vmatpush1.msra.mxu0 %v350
          %436 = vmatprep.subr.mxu0 0.0
          %437 = vmatpush1.msra.mxu0 %v351
          %438 = vmatprep.subr.mxu0 0.0
          %439 = vmatpush1.msra.mxu0 %v352
          %440 = vmatprep.subr.mxu0 0.0
          %441 = vmatpush1.msra.mxu0 %v353
          %442 = vmatprep.subr.mxu0 0.0
          %443 = vmatpush1.msra.mxu0 %v354
          %444 = vmatprep.subr.mxu0 0.0
          %445 = vmatpush1.msra.mxu0 %v355
          %446 = vmatprep.subr.mxu0 0.0
          %447 = vmatpush1.msra.mxu0 %v356
          %448 = vmatprep.subr.mxu0 0.0
          %449 = vmatpush1.msra.mxu0 0.0
          %450 = vmatprep.subr.mxu0 0.0
          %451 = vmatpush1.msra.mxu0 0.0
          %452 = vmatprep.subr.mxu0 0.0
          %453 = vmatpush1.msra.mxu0 0.0
          %454 = vmatprep.subr.mxu0 0.0
          %455 = vmatpush1.msra.mxu0 0.0
          %456 = vmatprep.subr.mxu0 0.0
          %457 = vmatpush1.msra.mxu0 0.0
          %458 = vmatprep.subr.mxu0 0.0
          %459 = vmatpush1.msra.mxu0 0.0
          %460 = vmatprep.subr.mxu0 0.0
          %461 = vmatpush1.msra.mxu0 0.0
          %462 = vmatprep.subr.mxu0 0.0
          %463 = vmatpush1.msra.mxu0 0.0
          %464 = vmatprep.subr.mxu0 0.0
          %465 = vmatpush1.msra.mxu0 0.0
          %466 = vmatprep.subr.mxu0 0.0
          %467 = vmatpush1.msra.mxu0 0.0
          %468 = vmatprep.subr.mxu0 0.0
          %469 = vmatpush1.msra.mxu0 0.0
          %470 = vmatprep.subr.mxu0 0.0
          %471 = vmatpush1.msra.mxu0 0.0
          %472 = vmatprep.subr.mxu0 0.0
          %473 = vmatpush1.msra.mxu0 0.0
          %474 = vmatprep.subr.mxu0 0.0
          %475 = vmatpush1.msra.mxu0 0.0
          %476 = vmatprep.subr.mxu0 0.0
          %477 = vmatpush1.msra.mxu0 0.0
          %478 = vmatprep.subr.mxu0 0.0
          %479 = vmatpush1.msra.mxu0 0.0
          %480 = vmatprep.subr.mxu0 0.0
          %481 = vmatpush1.msra.mxu0 0.0
          %482 = vmatprep.subr.mxu0 0.0
          %483 = vmatpush1.msra.mxu0 0.0
          %484 = vmatprep.subr.mxu0 0.0
          %485 = vmatpush1.msra.mxu0 0.0
          %486 = vmatprep.subr.mxu0 0.0
          %487 = vmatpush1.msra.mxu0 0.0
          %488 = vmatprep.subr.mxu0 0.0
          %489 = vmatpush1.msra.mxu0 0.0
          %490 = vmatprep.subr.mxu0 0.0
          %491 = vmatpush1.msra.mxu0 0.0
          %492 = vmatprep.subr.mxu0 0.0
          %493 = vmatpush1.msra.mxu0 0.0
          %494 = vmatprep.subr.mxu0 0.0
          %495 = vmatpush1.msra.mxu0 0.0
          %496 = vmatprep.mubr.f32.mxu0 0.0
          %497 = vmatmul.mubr.f32.gmra.mrb[0].mxu0 %v359
          %v498 = vpop.f32.mrb[0].mxu0
          %v499 = vadd.f32 0.0, %v498
          %v500 = vpop.f32.mrb[0].mxu0
          %501 = vdwg.mxu0
          %v502 = vmax.f32 %v499, 0.0
          %v503 = vadd.f32 %v431, %v502
          %vm504 = vcmask 31744
          %v506 = vsel %vm504, %v325, 0
          %v509 = vsel %vm504, %v326, 0
          %v512 = vsel %vm504, %v327, 0
          %v515 = vsel %vm504, %v328, 0
          %v518 = vsel %vm504, %v329, 0
          %v521 = vsel %vm504, %v330, 0
          %v524 = vsel %vm504, %v331, 0
          %v527 = vsel %vm504, %v332, 0
          %vm529 = vcmask 1043456
          %v531 = vsel %vm529, %v503, 0
          %533 = vmatprep.subr.mxu0 0.0
          %534 = vmatpush1.msra.mxu0 %v531
          %535 = vmatprep.subr.mxu0 0.0
          %536 = vmatpush1.msra.mxu0 0.0
          %537 = vmatprep.subr.mxu0 0.0
          %538 = vmatpush1.msra.mxu0 0.0
          %539 = vmatprep.subr.mxu0 0.0
          %540 = vmatpush1.msra.mxu0 0.0
          %541 = vmatprep.subr.mxu0 0.0
          %542 = vmatpush1.msra.mxu0 0.0
          %543 = vmatprep.subr.mxu0 0.0
          %544 = vmatpush1.msra.mxu0 0.0
          %545 = vmatprep.subr.mxu0 0.0
          %546 = vmatpush1.msra.mxu0 0.0
          %547 = vmatprep.subr.mxu0 0.0
          %548 = vmatpush1.msra.mxu0 0.0
          %549 = vmatprep.subr.mxu0 0.0
          %550 = vmatpush1.msra.mxu0 0.0
          %551 = vmatprep.subr.mxu0 0.0
          %552 = vmatpush1.msra.mxu0 0.0
          %553 = vmatprep.subr.mxu0 0.0
          %554 = vmatpush1.msra.mxu0 0.0
          %555 = vmatprep.subr.mxu0 0.0
          %556 = vmatpush1.msra.mxu0 0.0
          %557 = vmatprep.subr.mxu0 0.0
          %558 = vmatpush1.msra.mxu0 0.0
          %559 = vmatprep.subr.mxu0 0.0
          %560 = vmatpush1.msra.mxu0 0.0
          %561 = vmatprep.subr.mxu0 0.0
          %562 = vmatpush1.msra.mxu0 0.0
          %563 = vmatprep.subr.mxu0 0.0
          %564 = vmatpush1.msra.mxu0 0.0
          %565 = vmatprep.subr.mxu0 0.0
          %566 = vmatpush1.msra.mxu0 0.0
          %567 = vmatprep.subr.mxu0 0.0
          %568 = vmatpush1.msra.mxu0 0.0
          %569 = vmatprep.subr.mxu0 0.0
          %570 = vmatpush1.msra.mxu0 0.0
          %571 = vmatprep.subr.mxu0 0.0
          %572 = vmatpush1.msra.mxu0 0.0
          %573 = vmatprep.subr.mxu0 0.0
          %574 = vmatpush1.msra.mxu0 0.0
          %575 = vmatprep.subr.mxu0 0.0
          %576 = vmatpush1.msra.mxu0 0.0
          %577 = vmatprep.subr.mxu0 0.0
          %578 = vmatpush1.msra.mxu0 0.0
          %579 = vmatprep.subr.mxu0 0.0
          %580 = vmatpush1.msra.mxu0 0.0
          %581 = vmatprep.subr.mxu0 0.0
          %582 = vmatpush1.msra.mxu0 0.0
          %583 = vmatprep.subr.mxu0 0.0
          %584 = vmatpush1.msra.mxu0 0.0
          %585 = vmatprep.subr.mxu0 0.0
          %586 = vmatpush1.msra.mxu0 0.0
          %587 = vmatprep.subr.mxu0 0.0
          %588 = vmatpush1.msra.mxu0 0.0
          %589 = vmatprep.subr.mxu0 0.0
          %590 = vmatpush1.msra.mxu0 0.0
          %591 = vmatprep.subr.mxu0 0.0
          %592 = vmatpush1.msra.mxu0 0.0
          %593 = vmatprep.subr.mxu0 0.0
          %594 = vmatpush1.msra.mxu0 0.0
          %595 = vmatprep.subr.mxu0 0.0
          %596 = vmatpush1.msra.mxu0 0.0
          %597 = vmatprep.mubr.f32.mxu0 0.0
          %598 = vmatmul.mubr.f32.gmra.mrb[0].mxu0 %v506
          %v599 = vpop.f32.mrb[0].mxu0
          %v600 = vadd.f32 0.0, %v599
          %v601 = vpop.f32.mrb[0].mxu0
          %602 = vmatprep.mubr.f32.mxu0 0.0
          %603 = vmatmul.mubr.f32.gmra.mrb[0].mxu0 %v509
          %v604 = vpop.f32.mrb[0].mxu0
          %v605 = vadd.f32 0.0, %v604
          %v606 = vpop.f32.mrb[0].mxu0
          %607 = vmatprep.mubr.f32.mxu0 0.0
          %608 = vmatmul.mubr.f32.gmra.mrb[0].mxu0 %v512
          %v609 = vpop.f32.mrb[0].mxu0
          %v610 = vadd.f32 0.0, %v609
          %v611 = vpop.f32.mrb[0].mxu0
          %612 = vmatprep.mubr.f32.mxu0 0.0
          %613 = vmatmul.mubr.f32.gmra.mrb[0].mxu0 %v515
          %v614 = vpop.f32.mrb[0].mxu0
          %v615 = vadd.f32 0.0, %v614
          %v616 = vpop.f32.mrb[0].mxu0
          %617 = vmatprep.mubr.f32.mxu0 0.0
          %618 = vmatmul.mubr.f32.gmra.mrb[0].mxu0 %v518
          %v619 = vpop.f32.mrb[0].mxu0
          %v620 = vadd.f32 0.0, %v619
          %v621 = vpop.f32.mrb[0].mxu0
          %622 = vmatprep.mubr.f32.mxu0 0.0
          %623 = vmatmul.mubr.f32.gmra.mrb[0].mxu0 %v521
          %v624 = vpop.f32.mrb[0].mxu0
          %v625 = vadd.f32 0.0, %v624
          %v626 = vpop.f32.mrb[0].mxu0
          %627 = vmatprep.mubr.f32.mxu0 0.0
          %628 = vmatmul.mubr.f32.gmra.mrb[0].mxu0 %v524
          %v629 = vpop.f32.mrb[0].mxu0
          %v630 = vadd.f32 0.0, %v629
          %v631 = vpop.f32.mrb[0].mxu0
          %632 = vmatprep.mubr.f32.mxu0 0.0
          %633 = vmatmul.mubr.f32.gmra.mrb[0].mxu0 %v527
          %v634 = vpop.f32.mrb[0].mxu0
          %v635 = vadd.f32 0.0, %v634
          %v636 = vpop.f32.mrb[0].mxu0
          %637 = vdwg.mxu0
          %v638 = vsub.f32 0.0, %v600
          %v639 = vsub.f32 0.0, %v605
          %v640 = vsub.f32 0.0, %v610
          %v641 = vsub.f32 0.0, %v615
          %v642 = vsub.f32 0.0, %v620
          %v643 = vsub.f32 0.0, %v625
          %v644 = vsub.f32 0.0, %v630
          %v645 = vsub.f32 0.0, %v635
          %v646 = vmul.f32 %v638, 1.442695
          %v647 = vpow.pop %v646
          %v648 = vmul.f32 %v639, 1.442695
          %v649 = vpow.pop %v648
          %v650 = vmul.f32 %v640, 1.442695
          %v651 = vpow.pop %v650
          %v652 = vmul.f32 %v641, 1.442695
          %v653 = vpow.pop %v652
          %v654 = vmul.f32 %v642, 1.442695
          %v655 = vpow.pop %v654
          %v656 = vmul.f32 %v643, 1.442695
          %v657 = vpow.pop %v656
          %v658 = vmul.f32 %v644, 1.442695
          %v659 = vpow.pop %v658
          %v660 = vmul.f32 %v645, 1.442695
          %v661 = vpow.pop %v660
          %v662 = vadd.f32 %v647, 1.0
          %v663 = vadd.f32 %v649, 1.0
          %v664 = vadd.f32 %v651, 1.0
          %v665 = vadd.f32 %v653, 1.0
          %v666 = vadd.f32 %v655, 1.0
          %v667 = vadd.f32 %v657, 1.0
          %v668 = vadd.f32 %v659, 1.0
          %v669 = vadd.f32 %v661, 1.0
          %v670 = vrcp.pop %v662
          %v671 = vmul.f32 1.0, %v670
          %v672 = vrcp.pop %v663
          %v673 = vmul.f32 1.0, %v672
          %v674 = vrcp.pop %v664
          %v675 = vmul.f32 1.0, %v674
          %v676 = vrcp.pop %v665
          %v677 = vmul.f32 1.0, %v676
          %v678 = vrcp.pop %v666
          %v679 = vmul.f32 1.0, %v678
          %v680 = vrcp.pop %v667
          %v681 = vmul.f32 1.0, %v680
          %v682 = vrcp.pop %v668
          %v683 = vmul.f32 1.0, %v682
          %v684 = vrcp.pop %v669
          %v685 = vmul.f32 1.0, %v684
          %vm686 = vcmask 7168
          %687 = vst.msk [vmem:[%s205] sm:$0xff] %vm686, %v671
          %688 = vst.msk [vmem:[%s205 + $0x8] sm:$0xff] %vm686, %v673
          %689 = vst.msk [vmem:[%s205 + $0x10] sm:$0xff] %vm686, %v675
          %690 = vst.msk [vmem:[%s205 + $0x18] sm:$0xff] %vm686, %v677
          %691 = vst.msk [vmem:[%s205 + $0x20] sm:$0xff] %vm686, %v679
          %692 = vst.msk [vmem:[%s205 + $0x28] sm:$0xff] %vm686, %v681
          %693 = vst.msk [vmem:[%s205 + $0x30] sm:$0xff] %vm686, %v683
          %694 = vst.msk [vmem:[%s205 + $0x38] sm:$0xff] %vm686, %v685
        $region48: #{tpu_custom_call.1} parent=31 // pred_fallthru
          _
        %p695 = scmp.lt.s32.totalorder %s21, 1
        %s696 = scalar_select %p695, %s21, 1
        %s697 = smul.addr %s696, 8
        %s698 = smul.addr %s697, 8
        %s699 = scalar_lea.vmem %s3, %s698
        // Predicated region
        $region49: #{tpu_custom_call.1} parent=31 // pred_check
          %p700 = pneg %p117
        $region50: #{tpu_custom_call.1} parent=31 // pred_check_branch
          %702 = sbr.rel (%p700) target = $region52
        $region51: #{tpu_custom_call.1} parent=31 // pred_region
          _
        $region52: #{tpu_custom_call.1} parent=31 // pred_fallthru
          _
      $region32: #{tpu_custom_call.1} parent=5 // pred_fallthru
        _
      %p703 = scmp.le.s32.totalorder 2, %s12
      // Predicated region
      $region53: #{tpu_custom_call.1} parent=5 // pred_check
        %p704 = pneg %p703
      $region54: #{tpu_custom_call.1} parent=5 // pred_check_branch
        %706 = sbr.rel (%p704) target = $region56
      $region55: #{tpu_custom_call.1} parent=5 // pred_region
        %s707 = ssub.s32 %s12, 2
        // Predicated region
        $region57: #{tpu_custom_call.1} parent=55 // pred_check
          %p708 = pneg %p123
        $region58: #{tpu_custom_call.1} parent=55 // pred_check_branch
          %710 = sbr.rel (%p708) target = $region60
        $region59: #{tpu_custom_call.1} parent=55 // pred_region
          %p711 = scmp.lt.s32.totalorder %s23, 1
          %s712 = scalar_select %p711, %s23, 1
          %s713 = smul.addr %s712, 8
          %s714 = smul.addr %s713, 8
          %s715 = scalar_lea.vmem %s3, %s714
        $region60: #{tpu_custom_call.1} parent=55 // pred_fallthru
          _
      $region56: #{tpu_custom_call.1} parent=5 // pred_fallthru
        _
    $region6: #{tpu_custom_call.1} parent=1 // loop_footer
      %s16 = sadd.s32 1, %s12
    $region7: #{tpu_custom_call.1} parent=1 // loop_footer_branch
      %11 = sbr.rel target = $region3
    $region8: #{tpu_custom_call.1} parent=1 // loop_exit
      _
    %716 = vsyncpa [#allocation5], 1
    %s717 = scalar_lea.sflag [#allocation5], 1
    %718 = vsyncpa %s717, 1

</llo_original>
